<compile_context>
chip_gen: v6e
topology: v6e:2x2x1
jax: 0.10.0
libtpu: 0.0.40
codegen_flags: <defaults>
</compile_context>

<pallas_src>
import jax
import jax.numpy as jnp
from jax.experimental import pallas as pl
from jax.experimental.pallas import tpu as pltpu


def gcn_kernel(x_ref, w1t_ref, b1_ref, w2_ref, o_ref, h_ref):
    # x_ref:   (B, S, N)   input in the natural PyTorch layout
    # w1t_ref: (N, N)      conv1 weight, pre-transposed (W1^T)
    # b1_ref:  (1, N)      conv1 bias
    # w2_ref:  (S, S)      conv2 weight
    # o_ref:   (S, B*N)    lane-packed output
    # h_ref:   (S, B*N)    lane-packed VMEM scratch holding relu(conv1(x) + x)
    w1t = w1t_ref[...]
    b1 = b1_ref[...]
    bsz = x_ref.shape[0]
    n = w1t.shape[0]

    # conv1 + bias + residual + relu, one batch element at a time (static unroll; B is
    # tiny here).  H[s, b*N + n] = relu(conv1(x) + x)[b, s, n].
    for b in range(bsz):
        xb = x_ref[b]                                                    # (S, N)
        h1 = jnp.dot(xb, w1t, preferred_element_type=jnp.float32) + b1   # (S, N)
        h_ref[:, b * n:(b + 1) * n] = jnp.maximum(h1 + xb, 0.0)

    # conv2 (no bias): one wide, lane-dense matmul  (S,S) @ (S, B*N) -> (S, B*N).
    out = jnp.dot(w2_ref[...], h_ref[...], preferred_element_type=jnp.float32)
    o_ref[...] = out.astype(o_ref.dtype)


def gcn_forward(x, w1, b1, w2):
    B, S, N = x.shape
    w1t = w1.T                     # hoist the transpose out of the kernel (done once)
    b1r = b1.reshape(1, N)

    out_packed = pl.pallas_call(
        gcn_kernel,
        out_shape=jax.ShapeDtypeStruct((S, B * N), x.dtype),
        grid_spec=pltpu.PrefetchScalarGridSpec(
            num_scalar_prefetch=0,
            grid=(1,),                       # single fused step; everything stays resident
            in_specs=[
                pl.BlockSpec((B, S, N), lambda i: (0, 0, 0)),
                pl.BlockSpec((N, N), lambda i: (0, 0)),
                pl.BlockSpec((1, N), lambda i: (0, 0)),
                pl.BlockSpec((S, S), lambda i: (0, 0)),
            ],
            out_specs=pl.BlockSpec((S, B * N), lambda i: (0, 0)),
            scratch_shapes=[pltpu.VMEM((S, B * N), jnp.float32)],
        ),
        compiler_params=pltpu.CompilerParams(
            dimension_semantics=("arbitrary",)),
    )(x, w1t, b1r, w2)

    # Un-pack (S, B*N) -> (B, S, N) to match the PyTorch output layout.
    return jnp.transpose(out_packed.reshape(S, B, N), (1, 0, 2))


def gcn_reference(x, w1, b1, w2):
    # Pure-JAX reference mirroring the PyTorch forward.
    h1 = jnp.einsum("bsn,mn->bsm", x, w1) + b1[None, None, :]   # conv1 on permuted x
    h = jnp.maximum(h1 + x, 0.0)
    return jnp.einsum("ts,bsn->btn", w2, h)                      # conv2, no bias


if __name__ == "__main__":
    B, num_state, num_node = 2, 32, 16

    key = jax.random.PRNGKey(0)
    kx, kw1, kb1, kw2 = jax.random.split(key, 4)

    x = jax.random.normal(kx, (B, num_state, num_node), dtype=jnp.float32)
    # Deterministic synthetic parameters (Conv1d kernel_size=1 weights squeezed).
    w1 = jax.random.normal(kw1, (num_node, num_node), dtype=jnp.float32) * 0.1
    b1 = jax.random.normal(kb1, (num_node,), dtype=jnp.float32) * 0.1
    w2 = jax.random.normal(kw2, (num_state, num_state), dtype=jnp.float32) * 0.1

    out = gcn_forward(x, w1, b1, w2)
    out = jax.block_until_ready(out)

    ref = gcn_reference(x, w1, b1, w2)
    assert out.shape == (B, num_state, num_node)
    assert jnp.allclose(out, ref, atol=1e-4, rtol=1e-4), "mismatch vs reference"

    print("KERNEL_OK")
</pallas_src>

<mosaic_0001>
module attributes {stable_mosaic.version = 11 : i64} {
  func.func @gcn_kernel(%arg0: i32, %arg1: memref<2x32x16xf32, #tpu.memory_space<vmem>>, %arg2: memref<16x16xf32, #tpu.memory_space<vmem>>, %arg3: memref<1x16xf32, #tpu.memory_space<vmem>>, %arg4: memref<32x32xf32, #tpu.memory_space<vmem>>, %arg5: memref<32x32xf32, #tpu.memory_space<vmem>>, %arg6: memref<32x32xf32, #tpu.memory_space<vmem>>) attributes {dimension_semantics = [#tpu.dimension_semantics<arbitrary>], iteration_bounds = array<i64: 1>, scalar_prefetch = 0 : i64, scratch_operands = 1 : i64, tpu.core_type = #tpu.core_type<tc>, window_params = [{pipeline_mode = #tpu.pipeline_mode<synchronous>, transform_indices = @transform_0, window_bounds = array<i64: 2, 32, 16>}, {pipeline_mode = #tpu.pipeline_mode<synchronous>, transform_indices = @transform_1, window_bounds = array<i64: 16, 16>}, {pipeline_mode = #tpu.pipeline_mode<synchronous>, transform_indices = @transform_2, window_bounds = array<i64: 1, 16>}, {pipeline_mode = #tpu.pipeline_mode<synchronous>, transform_indices = @transform_3, window_bounds = array<i64: 32, 32>}, {pipeline_mode = #tpu.pipeline_mode<synchronous>, transform_indices = @transform_4, window_bounds = array<i64: 32, 32>}]} {
    %c0 = arith.constant 0 : index
    %c0_0 = arith.constant 0 : index
    %0 = vector.load %arg2[%c0, %c0_0] : memref<16x16xf32, #tpu.memory_space<vmem>>, vector<16x16xf32>
    %c0_1 = arith.constant 0 : index
    %c0_2 = arith.constant 0 : index
    %1 = vector.load %arg3[%c0_1, %c0_2] : memref<1x16xf32, #tpu.memory_space<vmem>>, vector<1x16xf32>
    %c0_3 = arith.constant 0 : index
    %c0_4 = arith.constant 0 : index
    %c0_5 = arith.constant 0 : index
    %2 = vector.load %arg1[%c0_3, %c0_4, %c0_5] : memref<2x32x16xf32, #tpu.memory_space<vmem>>, vector<1x32x16xf32>
    %3 = vector.shape_cast %2 : vector<1x32x16xf32> to vector<32x16xf32>
    %cst = arith.constant dense<0.000000e+00> : vector<32x16xf32>
    %4 = tpu.matmul %3, %0, %cst {dimension_numbers = #tpu.dot_dimension_numbers<[1], [0], [0], [1], [0, 0, 1, 1], [], []>} : vector<32x16xf32>, vector<16x16xf32>, vector<32x16xf32> -> vector<32x16xf32>
    %5 = vector.broadcast %1 : vector<1x16xf32> to vector<32x16xf32>
    %6 = arith.addf %4, %5 : vector<32x16xf32>
    %7 = arith.addf %6, %3 : vector<32x16xf32>
    %cst_6 = arith.constant 0.000000e+00 : f32
    %8 = vector.broadcast %cst_6 : f32 to vector<32x16xf32>
    %9 = arith.maximumf %7, %8 : vector<32x16xf32>
    %c0_7 = arith.constant 0 : index
    %c0_8 = arith.constant 0 : index
    %10 = vector.load %arg6[%c0_7, %c0_8] : memref<32x32xf32, #tpu.memory_space<vmem>>, vector<32x16xf32>
    tpu.vector_store %arg6[%c0_7, %c0_8], %9 {strides = array<i32>} : memref<32x32xf32, #tpu.memory_space<vmem>>, vector<32x16xf32>,
    %c1 = arith.constant 1 : index
    %c0_9 = arith.constant 0 : index
    %c0_10 = arith.constant 0 : index
    %11 = vector.load %arg1[%c1, %c0_9, %c0_10] : memref<2x32x16xf32, #tpu.memory_space<vmem>>, vector<1x32x16xf32>
    %12 = vector.shape_cast %11 : vector<1x32x16xf32> to vector<32x16xf32>
    %cst_11 = arith.constant dense<0.000000e+00> : vector<32x16xf32>
    %13 = tpu.matmul %12, %0, %cst_11 {dimension_numbers = #tpu.dot_dimension_numbers<[1], [0], [0], [1], [0, 0, 1, 1], [], []>} : vector<32x16xf32>, vector<16x16xf32>, vector<32x16xf32> -> vector<32x16xf32>
    %14 = vector.broadcast %1 : vector<1x16xf32> to vector<32x16xf32>
    %15 = arith.addf %13, %14 : vector<32x16xf32>
    %16 = arith.addf %15, %12 : vector<32x16xf32>
    %cst_12 = arith.constant 0.000000e+00 : f32
    %17 = vector.broadcast %cst_12 : f32 to vector<32x16xf32>
    %18 = arith.maximumf %16, %17 : vector<32x16xf32>
    %c0_13 = arith.constant 0 : index
    %c16 = arith.constant 16 : index
    %19 = vector.load %arg6[%c0_13, %c16] : memref<32x32xf32, #tpu.memory_space<vmem>>, vector<32x16xf32>
    tpu.vector_store %arg6[%c0_13, %c16], %18 {strides = array<i32>} : memref<32x32xf32, #tpu.memory_space<vmem>>, vector<32x16xf32>,
    %c0_14 = arith.constant 0 : index
    %c0_15 = arith.constant 0 : index
    %20 = vector.load %arg4[%c0_14, %c0_15] : memref<32x32xf32, #tpu.memory_space<vmem>>, vector<32x32xf32>
    %c0_16 = arith.constant 0 : index
    %c0_17 = arith.constant 0 : index
    %21 = vector.load %arg6[%c0_16, %c0_17] : memref<32x32xf32, #tpu.memory_space<vmem>>, vector<32x32xf32>
    %cst_18 = arith.constant dense<0.000000e+00> : vector<32x32xf32>
    %22 = tpu.matmul %20, %21, %cst_18 {dimension_numbers = #tpu.dot_dimension_numbers<[1], [0], [0], [1], [0, 0, 1, 1], [], []>} : vector<32x32xf32>, vector<32x32xf32>, vector<32x32xf32> -> vector<32x32xf32>
    %c0_19 = arith.constant 0 : index
    %c0_20 = arith.constant 0 : index
    %23 = vector.load %arg5[%c0_19, %c0_20] : memref<32x32xf32, #tpu.memory_space<vmem>>, vector<32x32xf32>
    tpu.vector_store %arg5[%c0_19, %c0_20], %22 {strides = array<i32>} : memref<32x32xf32, #tpu.memory_space<vmem>>, vector<32x32xf32>,
    return
  }
  func.func @transform_0(%arg0: i32) -> (i32, i32, i32) {
    %c0_i32 = arith.constant 0 : i32
    %c0_i32_0 = arith.constant 0 : i32
    %c0_i32_1 = arith.constant 0 : i32
    %c0_i32_2 = arith.constant 0 : i32
    return %c0_i32, %c0_i32_0, %c0_i32_1 : i32, i32, i32
  }
  func.func @transform_1(%arg0: i32) -> (i32, i32) {
    %c0_i32 = arith.constant 0 : i32
    %c0_i32_0 = arith.constant 0 : i32
    %c0_i32_1 = arith.constant 0 : i32
    return %c0_i32, %c0_i32_0 : i32, i32
  }
  func.func @transform_2(%arg0: i32) -> (i32, i32) {
    %c0_i32 = arith.constant 0 : i32
    %c0_i32_0 = arith.constant 0 : i32
    %c0_i32_1 = arith.constant 0 : i32
    return %c0_i32, %c0_i32_0 : i32, i32
  }
  func.func @transform_3(%arg0: i32) -> (i32, i32) {
    %c0_i32 = arith.constant 0 : i32
    %c0_i32_0 = arith.constant 0 : i32
    %c0_i32_1 = arith.constant 0 : i32
    return %c0_i32, %c0_i32_0 : i32, i32
  }
  func.func @transform_4(%arg0: i32) -> (i32, i32) {
    %c0_i32 = arith.constant 0 : i32
    %c0_i32_0 = arith.constant 0 : i32
    %c0_i32_1 = arith.constant 0 : i32
    return %c0_i32, %c0_i32_0 : i32, i32
  }
}

</mosaic_0001>

<llo_original>
// kernel: tpu_custom_call.1
$region0: #{tpu_custom_call.1}
  #allocation0 [shape = 'u32[]', space=smem, size = 0x4, offset = 0x4, fixed_abs, tag = 'smem constant byte address 0x4 - core index']
  #allocation1 [shape = 'u32[144,128]{1,0:T(1,128)}', space=vmem, size = 0x12000, scoped, tag = 'internal scratch']
  #allocation2 [shape = 'f32[32,32]{1,0:T(8,128)}', space=vmem, size = 0x4000, scoped, tag = 'scratch operand']
  %s0 = inlined_call_operand.vmem [shape: f32[2,32,16], index: 0, kind: input, shape index: {}]
  %s1 = inlined_call_operand.vmem [shape: f32[16,16], index: 1, kind: input, shape index: {}]
  %s2 = inlined_call_operand.vmem [shape: f32[1,16], index: 2, kind: input, shape index: {}]
  %s3 = inlined_call_operand.vmem [shape: f32[32,32], index: 3, kind: input, shape index: {}]
  %s4 = inlined_call_operand.hbm [shape: f32[32,32], index: 4, kind: output, shape index: {}]
  %s5 = sld [smem:[#allocation0]]
  $region26: #{tpu_custom_call.1} parent=0
    _
  %s7 = ssub.s32 1, %s5
  %s8 = scalar_select 0, %s7, %s5
  $region1: #{tpu_custom_call.1} parent=0
    #allocation3 [shape = 'u8[16384]{0}', space=vmem, size = 0x4000, scoped, tag = 'output window, operand 0, single buffered']
    #allocation4 [shape = 's32[1]{0}', space=sflag, size = 0x4, scoped, tag = 'scoped memory for tpu_custom_call.1']
    %9 = vsyncpa [#allocation4], 0
    // Predicated region
    $region2: #{tpu_custom_call.1} parent=1 // pred_check
      _
    $region3: #{tpu_custom_call.1} parent=1 // pred_check_branch
      %11 = sbr.rel (0) target = $region5
    $region4: #{tpu_custom_call.1} parent=1 // pred_region
      _
    $region5: #{tpu_custom_call.1} parent=1 // pred_fallthru
      _
    // Predicated region
    $region6: #{tpu_custom_call.1} parent=1 // pred_check
      _
    $region7: #{tpu_custom_call.1} parent=1 // pred_check_branch
      %13 = sbr.rel (0) target = $region9
    $region8: #{tpu_custom_call.1} parent=1 // pred_region
      _
    $region9: #{tpu_custom_call.1} parent=1 // pred_fallthru
      _
    // Predicated region
    $region10: #{tpu_custom_call.1} parent=1 // pred_check
      _
    $region11: #{tpu_custom_call.1} parent=1 // pred_check_branch
      %15 = sbr.rel (0) target = $region13
    $region12: #{tpu_custom_call.1} parent=1 // pred_region
      _
    $region13: #{tpu_custom_call.1} parent=1 // pred_fallthru
      _
    // Predicated region
    $region14: #{tpu_custom_call.1} parent=1 // pred_check
      _
    $region15: #{tpu_custom_call.1} parent=1 // pred_check_branch
      %17 = sbr.rel (0) target = $region17
    $region16: #{tpu_custom_call.1} parent=1 // pred_region
      _
    $region17: #{tpu_custom_call.1} parent=1 // pred_fallthru
      _
    %v18 = vld [vmem:[%s1] sm:$0xff]
    %v19 = vld [vmem:[%s1 + $0x8] sm:$0xff]
    %v20 = vld [vmem:[%s2] sm:$0x1]
    %v21 = vld [vmem:[%s0] sm:$0xff]
    %v22 = vld [vmem:[%s0 + $0x8] sm:$0xff]
    %v23 = vld [vmem:[%s0 + $0x10] sm:$0xff]
    %v24 = vld [vmem:[%s0 + $0x18] sm:$0xff]
    %v26 = vlaneseq
    %v27 = vshrl.u32 %v26, 7
    %v28 = vsub.s32 0, %v27
    %v29 = vrot.slane %v20, %v28
    %vm31 = vcmask 130048
    %v33 = vsel %vm31, %v21, 0
    %v36 = vsel %vm31, %v22, 0
    %v39 = vsel %vm31, %v23, 0
    %v42 = vsel %vm31, %v24, 0
    %44 = vmatprep.subr.mxu0 0.0
    %45 = vmatpush1.msra.mxu0 0.0
    %46 = vmatprep.subr.mxu0 0.0
    %47 = vmatpush1.msra.mxu0 0.0
    %48 = vmatprep.subr.mxu0 0.0
    %49 = vmatpush1.msra.mxu0 0.0
    %50 = vmatprep.subr.mxu0 0.0
    %51 = vmatpush1.msra.mxu0 0.0
    %52 = vmatprep.subr.mxu0 0.0
    %53 = vmatpush1.msra.mxu0 0.0
    %54 = vmatprep.subr.mxu0 0.0
    %55 = vmatpush1.msra.mxu0 0.0
    %56 = vmatprep.subr.mxu0 0.0
    %57 = vmatpush1.msra.mxu0 0.0
    %58 = vmatprep.subr.mxu0 0.0
    %59 = vmatpush1.msra.mxu0 0.0
    %60 = vmatprep.subr.mxu0 0.0
    %61 = vmatpush1.msra.mxu0 0.0
    %62 = vmatprep.subr.mxu0 0.0
    %63 = vmatpush1.msra.mxu0 0.0
    %64 = vmatprep.subr.mxu0 0.0
    %65 = vmatpush1.msra.mxu0 0.0
    %66 = vmatprep.subr.mxu0 0.0
    %67 = vmatpush1.msra.mxu0 0.0
    %68 = vmatprep.subr.mxu0 0.0
    %69 = vmatpush1.msra.mxu0 0.0
    %70 = vmatprep.subr.mxu0 0.0
    %71 = vmatpush1.msra.mxu0 0.0
    %72 = vmatprep.subr.mxu0 0.0
    %73 = vmatpush1.msra.mxu0 %v19
    %74 = vmatprep.subr.mxu0 0.0
    %75 = vmatpush1.msra.mxu0 %v18
    %76 = vmatprep.subr.mxu0 0.0
    %77 = vmatpush2.msra.mxu0 0.0
    %78 = vmatprep.subr.mxu0 0.0
    %79 = vmatpush2.msra.mxu0 0.0
    %80 = vmatprep.subr.mxu0 0.0
    %81 = vmatpush2.msra.mxu0 0.0
    %82 = vmatprep.subr.mxu0 0.0
    %83 = vmatpush2.msra.mxu0 0.0
    %84 = vmatprep.subr.mxu0 0.0
    %85 = vmatpush2.msra.mxu0 0.0
    %86 = vmatprep.subr.mxu0 0.0
    %87 = vmatpush2.msra.mxu0 0.0
    %88 = vmatprep.subr.mxu0 0.0
    %89 = vmatpush2.msra.mxu0 0.0
    %90 = vmatprep.subr.mxu0 0.0
    %91 = vmatpush2.msra.mxu0 0.0
    %92 = vmatprep.subr.mxu0 0.0
    %93 = vmatpush2.msra.mxu0 0.0
    %94 = vmatprep.subr.mxu0 0.0
    %95 = vmatpush2.msra.mxu0 0.0
    %96 = vmatprep.subr.mxu0 0.0
    %97 = vmatpush2.msra.mxu0 0.0
    %98 = vmatprep.subr.mxu0 0.0
    %99 = vmatpush2.msra.mxu0 0.0
    %100 = vmatprep.subr.mxu0 0.0
    %101 = vmatpush2.msra.mxu0 0.0
    %102 = vmatprep.subr.mxu0 0.0
    %103 = vmatpush2.msra.mxu0 0.0
    %104 = vmatprep.subr.mxu0 0.0
    %105 = vmatpush2.msra.mxu0 0.0
    %106 = vmatprep.subr.mxu0 0.0
    %107 = vmatpush2.msra.mxu0 0.0
    %108 = vmatprep.mubr.f32.mxu0 0.0
    %109 = vmatmul.mubr.f32.gmra.mxu0 %v33
    %v110 = vpop.f32.mrf.mxu0
    %v111 = vadd.f32 %v29, %v110
    %v112 = vpop.f32.mrf.mxu0
    %113 = vmatprep.mubr.f32.mxu0 0.0
    %114 = vmatmul.mubr.f32.gmra.mxu0 %v36
    %v115 = vpop.f32.mrf.mxu0
    %v116 = vadd.f32 %v29, %v115
    %v117 = vpop.f32.mrf.mxu0
    %118 = vmatprep.mubr.f32.mxu0 0.0
    %119 = vmatmul.mubr.f32.gmra.mxu0 %v39
    %v120 = vpop.f32.mrf.mxu0
    %v121 = vadd.f32 %v29, %v120
    %v122 = vpop.f32.mrf.mxu0
    %123 = vmatprep.mubr.f32.mxu0 0.0
    %124 = vmatmul.mubr.f32.gmra.mxu0 %v42
    %v125 = vpop.f32.mrf.mxu0
    %v126 = vadd.f32 %v29, %v125
    %v127 = vpop.f32.mrf.mxu0
    %128 = vdwg.mxu0
    %v129 = vadd.f32 %v111, %v21
    %v130 = vadd.f32 %v116, %v22
    %v131 = vadd.f32 %v121, %v23
    %v132 = vadd.f32 %v126, %v24
    %v133 = vmax.f32 %v129, 0.0
    %v134 = vmax.f32 %v130, 0.0
    %v135 = vmax.f32 %v131, 0.0
    %v136 = vmax.f32 %v132, 0.0
    %137 = vst.msk [vmem:[#allocation2] sm:$0xff] %vm31, %v133
    %138 = vst.msk [vmem:[#allocation2 + $0x8] sm:$0xff] %vm31, %v134
    %139 = vst.msk [vmem:[#allocation2 + $0x10] sm:$0xff] %vm31, %v135
    %140 = vst.msk [vmem:[#allocation2 + $0x18] sm:$0xff] %vm31, %v136
    %s141 = scalar_lea.vmem %s0, 32
    %v142 = vld [vmem:[%s141] sm:$0xff]
    %v143 = vld [vmem:[%s141 + $0x8] sm:$0xff]
    %v144 = vld [vmem:[%s141 + $0x10] sm:$0xff]
    %v145 = vld [vmem:[%s141 + $0x18] sm:$0xff]
    %v147 = vsel %vm31, %v142, 0
    %v150 = vsel %vm31, %v143, 0
    %v153 = vsel %vm31, %v144, 0
    %v156 = vsel %vm31, %v145, 0
    %158 = vmatprep.subr.mxu0 0.0
    %159 = vmatpush1.msra.mxu0 0.0
    %160 = vmatprep.subr.mxu0 0.0
    %161 = vmatpush1.msra.mxu0 0.0
    %162 = vmatprep.subr.mxu0 0.0
    %163 = vmatpush1.msra.mxu0 0.0
    %164 = vmatprep.subr.mxu0 0.0
    %165 = vmatpush1.msra.mxu0 0.0
    %166 = vmatprep.subr.mxu0 0.0
    %167 = vmatpush1.msra.mxu0 0.0
    %168 = vmatprep.subr.mxu0 0.0
    %169 = vmatpush1.msra.mxu0 0.0
    %170 = vmatprep.subr.mxu0 0.0
    %171 = vmatpush1.msra.mxu0 0.0
    %172 = vmatprep.subr.mxu0 0.0
    %173 = vmatpush1.msra.mxu0 0.0
    %174 = vmatprep.subr.mxu0 0.0
    %175 = vmatpush1.msra.mxu0 0.0
    %176 = vmatprep.subr.mxu0 0.0
    %177 = vmatpush1.msra.mxu0 0.0
    %178 = vmatprep.subr.mxu0 0.0
    %179 = vmatpush1.msra.mxu0 0.0
    %180 = vmatprep.subr.mxu0 0.0
    %181 = vmatpush1.msra.mxu0 0.0
    %182 = vmatprep.subr.mxu0 0.0
    %183 = vmatpush1.msra.mxu0 0.0
    %184 = vmatprep.subr.mxu0 0.0
    %185 = vmatpush1.msra.mxu0 0.0
    %186 = vmatprep.subr.mxu0 0.0
    %187 = vmatpush1.msra.mxu0 %v19
    %188 = vmatprep.subr.mxu0 0.0
    %189 = vmatpush1.msra.mxu0 %v18
    %190 = vmatprep.subr.mxu0 0.0
    %191 = vmatpush2.msra.mxu0 0.0
    %192 = vmatprep.subr.mxu0 0.0
    %193 = vmatpush2.msra.mxu0 0.0
    %194 = vmatprep.subr.mxu0 0.0
    %195 = vmatpush2.msra.mxu0 0.0
    %196 = vmatprep.subr.mxu0 0.0
    %197 = vmatpush2.msra.mxu0 0.0
    %198 = vmatprep.subr.mxu0 0.0
    %199 = vmatpush2.msra.mxu0 0.0
    %200 = vmatprep.subr.mxu0 0.0
    %201 = vmatpush2.msra.mxu0 0.0
    %202 = vmatprep.subr.mxu0 0.0
    %203 = vmatpush2.msra.mxu0 0.0
    %204 = vmatprep.subr.mxu0 0.0
    %205 = vmatpush2.msra.mxu0 0.0
    %206 = vmatprep.subr.mxu0 0.0
    %207 = vmatpush2.msra.mxu0 0.0
    %208 = vmatprep.subr.mxu0 0.0
    %209 = vmatpush2.msra.mxu0 0.0
    %210 = vmatprep.subr.mxu0 0.0
    %211 = vmatpush2.msra.mxu0 0.0
    %212 = vmatprep.subr.mxu0 0.0
    %213 = vmatpush2.msra.mxu0 0.0
    %214 = vmatprep.subr.mxu0 0.0
    %215 = vmatpush2.msra.mxu0 0.0
    %216 = vmatprep.subr.mxu0 0.0
    %217 = vmatpush2.msra.mxu0 0.0
    %218 = vmatprep.subr.mxu0 0.0
    %219 = vmatpush2.msra.mxu0 0.0
    %220 = vmatprep.subr.mxu0 0.0
    %221 = vmatpush2.msra.mxu0 0.0
    %222 = vmatprep.mubr.f32.mxu0 0.0
    %223 = vmatmul.mubr.f32.gmra.mxu0 %v147
    %v224 = vpop.f32.mrf.mxu0
    %v225 = vadd.f32 %v29, %v224
    %v226 = vpop.f32.mrf.mxu0
    %227 = vmatprep.mubr.f32.mxu0 0.0
    %228 = vmatmul.mubr.f32.gmra.mxu0 %v150
    %v229 = vpop.f32.mrf.mxu0
    %v230 = vadd.f32 %v29, %v229
    %v231 = vpop.f32.mrf.mxu0
    %232 = vmatprep.mubr.f32.mxu0 0.0
    %233 = vmatmul.mubr.f32.gmra.mxu0 %v153
    %v234 = vpop.f32.mrf.mxu0
    %v235 = vadd.f32 %v29, %v234
    %v236 = vpop.f32.mrf.mxu0
    %237 = vmatprep.mubr.f32.mxu0 0.0
    %238 = vmatmul.mubr.f32.gmra.mxu0 %v156
    %v239 = vpop.f32.mrf.mxu0
    %v240 = vadd.f32 %v29, %v239
    %v241 = vpop.f32.mrf.mxu0
    %242 = vdwg.mxu0
    %v243 = vadd.f32 %v225, %v142
    %v244 = vadd.f32 %v230, %v143
    %v245 = vadd.f32 %v235, %v144
    %v246 = vadd.f32 %v240, %v145
    %v247 = vmax.f32 %v243, 0.0
    %v248 = vmax.f32 %v244, 0.0
    %v249 = vmax.f32 %v245, 0.0
    %v250 = vmax.f32 %v246, 0.0
    %255 = vrot.lane.b32.xlu0 %v247, 16
    %v256 = vpop.permute.xlu0 %255
    %257 = vrot.lane.b32.xlu0 %v248, 16
    %v258 = vpop.permute.xlu0 %257
    %259 = vrot.lane.b32.xlu0 %v249, 16
    %v260 = vpop.permute.xlu0 %259
    %261 = vrot.lane.b32.xlu0 %v250, 16
    %v262 = vpop.permute.xlu0 %261
    %vm267 = vcmask 261248
    %268 = vst.msk [vmem:[#allocation2] sm:$0xff] %vm267, %v256
    %269 = vst.msk [vmem:[#allocation2 + $0x8] sm:$0xff] %vm267, %v258
    %270 = vst.msk [vmem:[#allocation2 + $0x10] sm:$0xff] %vm267, %v260
    %271 = vst.msk [vmem:[#allocation2 + $0x18] sm:$0xff] %vm267, %v262
    %v272 = vld [vmem:[%s3] sm:$0xff]
    %v273 = vld [vmem:[%s3 + $0x8] sm:$0xff]
    %v274 = vld [vmem:[%s3 + $0x10] sm:$0xff]
    %v275 = vld [vmem:[%s3 + $0x18] sm:$0xff]
    %v276 = vld [vmem:[#allocation2] sm:$0xff]
    %v277 = vld [vmem:[#allocation2 + $0x8] sm:$0xff]
    %v278 = vld [vmem:[#allocation2 + $0x10] sm:$0xff]
    %v279 = vld [vmem:[#allocation2 + $0x18] sm:$0xff]
    %vm280 = vcmask 261120
    %v282 = vsel %vm280, %v272, 0
    %v285 = vsel %vm280, %v273, 0
    %v288 = vsel %vm280, %v274, 0
    %v291 = vsel %vm280, %v275, 0
    %293 = vmatprep.subr.mxu0 0.0
    %294 = vmatpush1.msra.mxu0 0.0
    %295 = vmatprep.subr.mxu0 0.0
    %296 = vmatpush1.msra.mxu0 0.0
    %297 = vmatprep.subr.mxu0 0.0
    %298 = vmatpush1.msra.mxu0 0.0
    %299 = vmatprep.subr.mxu0 0.0
    %300 = vmatpush1.msra.mxu0 0.0
    %301 = vmatprep.subr.mxu0 0.0
    %302 = vmatpush1.msra.mxu0 0.0
    %303 = vmatprep.subr.mxu0 0.0
    %304 = vmatpush1.msra.mxu0 0.0
    %305 = vmatprep.subr.mxu0 0.0
    %306 = vmatpush1.msra.mxu0 0.0
    %307 = vmatprep.subr.mxu0 0.0
    %308 = vmatpush1.msra.mxu0 0.0
    %309 = vmatprep.subr.mxu0 0.0
    %310 = vmatpush1.msra.mxu0 0.0
    %311 = vmatprep.subr.mxu0 0.0
    %312 = vmatpush1.msra.mxu0 0.0
    %313 = vmatprep.subr.mxu0 0.0
    %314 = vmatpush1.msra.mxu0 0.0
    %315 = vmatprep.subr.mxu0 0.0
    %316 = vmatpush1.msra.mxu0 0.0
    %317 = vmatprep.subr.mxu0 0.0
    %318 = vmatpush1.msra.mxu0 %v279
    %319 = vmatprep.subr.mxu0 0.0
    %320 = vmatpush1.msra.mxu0 %v278
    %321 = vmatprep.subr.mxu0 0.0
    %322 = vmatpush1.msra.mxu0 %v277
    %323 = vmatprep.subr.mxu0 0.0
    %324 = vmatpush1.msra.mxu0 %v276
    %325 = vmatprep.subr.mxu0 0.0
    %326 = vmatpush2.msra.mxu0 0.0
    %327 = vmatprep.subr.mxu0 0.0
    %328 = vmatpush2.msra.mxu0 0.0
    %329 = vmatprep.subr.mxu0 0.0
    %330 = vmatpush2.msra.mxu0 0.0
    %331 = vmatprep.subr.mxu0 0.0
    %332 = vmatpush2.msra.mxu0 0.0
    %333 = vmatprep.subr.mxu0 0.0
    %334 = vmatpush2.msra.mxu0 0.0
    %335 = vmatprep.subr.mxu0 0.0
    %336 = vmatpush2.msra.mxu0 0.0
    %337 = vmatprep.subr.mxu0 0.0
    %338 = vmatpush2.msra.mxu0 0.0
    %339 = vmatprep.subr.mxu0 0.0
    %340 = vmatpush2.msra.mxu0 0.0
    %341 = vmatprep.subr.mxu0 0.0
    %342 = vmatpush2.msra.mxu0 0.0
    %343 = vmatprep.subr.mxu0 0.0
    %344 = vmatpush2.msra.mxu0 0.0
    %345 = vmatprep.subr.mxu0 0.0
    %346 = vmatpush2.msra.mxu0 0.0
    %347 = vmatprep.subr.mxu0 0.0
    %348 = vmatpush2.msra.mxu0 0.0
    %349 = vmatprep.subr.mxu0 0.0
    %350 = vmatpush2.msra.mxu0 0.0
    %351 = vmatprep.subr.mxu0 0.0
    %352 = vmatpush2.msra.mxu0 0.0
    %353 = vmatprep.subr.mxu0 0.0
    %354 = vmatpush2.msra.mxu0 0.0
    %355 = vmatprep.subr.mxu0 0.0
    %356 = vmatpush2.msra.mxu0 0.0
    %357 = vmatprep.mubr.f32.mxu0 0.0
    %358 = vmatmul.mubr.f32.gmra.mxu0 %v282
    %v359 = vpop.f32.mrf.mxu0
    %v360 = vadd.f32 0.0, %v359
    %v361 = vpop.f32.mrf.mxu0
    %362 = vmatprep.mubr.f32.mxu0 0.0
    %363 = vmatmul.mubr.f32.gmra.mxu0 %v285
    %v364 = vpop.f32.mrf.mxu0
    %v365 = vadd.f32 0.0, %v364
    %v366 = vpop.f32.mrf.mxu0
    %367 = vmatprep.mubr.f32.mxu0 0.0
    %368 = vmatmul.mubr.f32.gmra.mxu0 %v288
    %v369 = vpop.f32.mrf.mxu0
    %v370 = vadd.f32 0.0, %v369
    %v371 = vpop.f32.mrf.mxu0
    %372 = vmatprep.mubr.f32.mxu0 0.0
    %373 = vmatmul.mubr.f32.gmra.mxu0 %v291
    %v374 = vpop.f32.mrf.mxu0
    %v375 = vadd.f32 0.0, %v374
    %v376 = vpop.f32.mrf.mxu0
    %377 = vdwg.mxu0
    %378 = vst.msk [vmem:[#allocation3] sm:$0xff] %vm280, %v360
    %379 = vst.msk [vmem:[#allocation3 + $0x8] sm:$0xff] %vm280, %v365
    %380 = vst.msk [vmem:[#allocation3 + $0x10] sm:$0xff] %vm280, %v370
    %381 = vst.msk [vmem:[#allocation3 + $0x18] sm:$0xff] %vm280, %v375
    // Predicated region
    $region18: #{tpu_custom_call.1} parent=1 // pred_check
      _
    $region19: #{tpu_custom_call.1} parent=1 // pred_check_branch
      %383 = sbr.rel (0) target = $region21
    $region20: #{tpu_custom_call.1} parent=1 // pred_region
      %s385 = ssub.s32 512, 512
      %386 = vsyncadd [#allocation4], %s385
      %s387 = sshll.u32 [#allocation3], 4
      %s388 = int_to_ptr.vmem [resolvable:$true] %s387
      %393 = dma.vmem_to_hbm [thread:$0]  %s388, 512, %s4, [#allocation4], 128, 128, 8
    $region21: #{tpu_custom_call.1} parent=1 // pred_fallthru
      _
    // Predicated region
    $region22: #{tpu_custom_call.1} parent=1 // pred_check
      _
    $region23: #{tpu_custom_call.1} parent=1 // pred_check_branch
      %395 = sbr.rel (0) target = $region25
    $region24: #{tpu_custom_call.1} parent=1 // pred_region
      %396 = dma.done [#allocation4], 512
    $region25: #{tpu_custom_call.1} parent=1 // pred_fallthru
      _
    %397 = vsyncpa [#allocation4], 1

</llo_original>
